<compile_context>
chip_gen: v7x
topology: tpu7x:2x2x1
jax: 0.10.0
libtpu: 0.0.40
codegen_flags: <defaults>
</compile_context>

<pallas_src>
import jax
import jax.numpy as jnp
from jax import lax
from jax.experimental import pallas as pl
from jax.experimental.pallas import tpu as pltpu


def _make_normal_kernel(tb: int, w_true: int):
    """Builds the kernel for a (tb, H, W_pad) input block and true width w_true."""

    def _normal_kernel(depth_ref, invk_ref, out_ref):
        # depth_ref: (TB, H, Wp)    VMEM  float32 depth (unpadded height, lane-padded width)
        # invk_ref:  (B * 9,)       SMEM  float32 flattened invK[:, :3, :3] (row-major)
        # out_ref:   (TB, 3, H, Wp) VMEM  normals
        g = pl.program_id(0)
        _, H, W = depth_ref.shape

        # Thin border masks (broadcast inside jnp.where) + pixel-centre coordinates.
        yi = lax.broadcasted_iota(jnp.int32, (H, 1), 0)            # (H, 1)
        xi = lax.broadcasted_iota(jnp.int32, (1, W), 1)            # (1, W)
        is_top, is_bot = yi == 0, yi == H - 1
        is_lft = xi == 0
        is_rgt = xi >= w_true - 1          # clamp at the *true* right edge (lane padding)
        ys = yi.astype(jnp.float32) + 0.5
        xs = xi.astype(jnp.float32) + 0.5

        # Replicate-padded unit shifts in-register: roll (XLU) + border select.
        def prev_row(a):   # a[max(y-1, 0), x]
            return jnp.where(is_top, a, pltpu.roll(a, 1, axis=0))

        def next_row(a):   # a[min(y+1, H-1), x]
            return jnp.where(is_bot, a, pltpu.roll(a, H - 1, axis=0))

        def prev_col(a):   # a[y, max(x-1, 0)]
            return jnp.where(is_lft, a, pltpu.roll(a, 1, axis=1))

        def next_col(a):   # a[y, min(x+1, w_true-1)]
            return jnp.where(is_rgt, a, pltpu.roll(a, W - 1, axis=1))

        for t in range(tb):
            d = depth_ref[t]                                       # (H, W)
            gx, gy = [], []
            for c in range(3):
                # Rank-1 ray term: k0*(x+.5) + (k1*(y+.5) + k2) from (1,W) + (H,1).
                base = (g * tb + t) * 9 + 3 * c
                k0 = invk_ref[base + 0]
                k1 = invk_ref[base + 1]
                k2 = invk_ref[base + 2]
                ray = (k0 * xs) + (k1 * ys + k2)                   # (H, W) broadcast-add
                a = d * ray                                        # back-projected cam coord

                a2 = a + a
                sy = prev_row(a) + a2 + next_row(a)                # vertical [1,2,1] smooth
                sx = prev_col(a) + a2 + next_col(a)                # horizontal [1,2,1] smooth
                gx.append(next_col(sy) - prev_col(sy))             # Sobel dX (unnormalized)
                gy.append(next_row(sx) - prev_row(sx))             # Sobel dY (unnormalized)

            # cross(dX, dY) over the channel axis.
            n0 = gx[1] * gy[2] - gx[2] * gy[1]
            n1 = gx[2] * gy[0] - gx[0] * gy[2]
            n2 = gx[0] * gy[1] - gx[1] * gy[0]

            # F.normalize(dim=1, eps=1e-12): x * rsqrt(max(||x||^2, 1e-24)).
            # (The dropped 1/8 Sobel factor only rescales n uniformly; cancelled here.)
            inv = lax.rsqrt(jnp.maximum(n0 * n0 + n1 * n1 + n2 * n2, 1e-24))

            out_ref[t, 0, :, :] = (n0 * inv).astype(out_ref.dtype)
            out_ref[t, 1, :, :] = (n1 * inv).astype(out_ref.dtype)
            out_ref[t, 2, :, :] = (n2 * inv).astype(out_ref.dtype)

    return _normal_kernel


def _pick_tb(B: int, H: int, Wp: int, budget_bytes: int = 24 << 20) -> int:
    """Largest divisor of B whose per-step VMEM footprint fits a conservative budget."""
    plane = H * Wp * 4
    # double-buffered I/O (depth + 3-ch out) plus ~12 live intermediate planes per image
    per_img = 2 * (4 * plane) + 12 * plane
    tb = max(1, min(B, budget_bytes // max(per_img, 1)))
    while B % tb:
        tb -= 1
    return tb


def normal_generator(depth_b1hw, invK_b44, out_dtype=jnp.float32):
    """Pallas implementation of NormalGenerator.forward.

    depth_b1hw: (B, 1, H, W) float32
    invK_b44:   (B, 4, 4)    float32
    returns     (B, 3, H, W) normals (out_dtype; bf16 variant useful on v5e)
    """
    B, _, H, W = depth_b1hw.shape
    Wp = ((W + 127) // 128) * 128                                   # lane-dense stores
    depth_bhw = depth_b1hw[:, 0].astype(jnp.float32)                # (B, H, W)
    if Wp != W:
        depth_bhw = jnp.pad(depth_bhw, ((0, 0), (0, 0), (0, Wp - W)), mode="edge")
    invk_flat = invK_b44[:, :3, :3].astype(jnp.float32).reshape(-1)  # (B*9,) for SMEM

    TB = _pick_tb(B, H, Wp)

    out = pl.pallas_call(
        _make_normal_kernel(TB, W),
        out_shape=jax.ShapeDtypeStruct((B, 3, H, Wp), out_dtype),
        grid_spec=pltpu.PrefetchScalarGridSpec(
            num_scalar_prefetch=0,
            grid=(B // TB,),
            in_specs=[
                pl.BlockSpec((TB, H, Wp), lambda g: (g, 0, 0)),
                pl.BlockSpec(memory_space=pltpu.MemorySpace.SMEM),   # flat invK in SMEM
            ],
            out_specs=pl.BlockSpec((TB, 3, H, Wp), lambda g: (g, 0, 0, 0)),
        ),
        compiler_params=pltpu.CompilerParams(dimension_semantics=("parallel",)),
    )(depth_bhw, invk_flat)

    if Wp != W:
        out = out[..., :W]
    return out


def _reference(depth_b1hw, invK_b44):
    """Pure-JAX reference mirroring the PyTorch/kornia semantics."""
    B, _, H, W = depth_b1hw.shape
    ys, xs = jnp.meshgrid(jnp.arange(H, dtype=jnp.float32),
                          jnp.arange(W, dtype=jnp.float32), indexing="ij")
    pix = jnp.stack([xs + 0.5, ys + 0.5, jnp.ones_like(xs)], 0).reshape(3, -1)  # (3, N)
    cam = jnp.einsum("bij,jn->bin", invK_b44[:, :3, :3], pix)
    cam = depth_b1hw.reshape(B, 1, -1) * cam
    cam = cam.reshape(B, 3, H, W)
    camp = jnp.pad(cam, ((0, 0), (0, 0), (1, 1), (1, 1)), mode="edge")
    kx = jnp.array([[-1., 0., 1.], [-2., 0., 2.], [-1., 0., 1.]], jnp.float32) / 8.0
    ky = kx.T

    def corr(k):
        out = jnp.zeros((B, 3, H, W), jnp.float32)
        for di in range(3):
            for dj in range(3):
                out = out + k[di, dj] * camp[:, :, di:di + H, dj:dj + W]
        return out

    gx, gy = corr(kx), corr(ky)
    n = jnp.cross(gx, gy, axis=1)
    norm = jnp.sqrt(jnp.sum(n * n, axis=1, keepdims=True))
    return n / jnp.maximum(norm, 1e-12)


if __name__ == "__main__":
    B, H, W = 2, 16, 128          # W = 128 keeps the output block lane-dense

    key = jax.random.PRNGKey(0)
    k_slope, k_phase, k_scale = jax.random.split(key, 3)

    # Smooth, positive synthetic depth (well-conditioned surface normals).
    slope = jax.random.uniform(k_slope, (B, 2), jnp.float32, -0.5, 0.5)
    phase = jax.random.uniform(k_phase, (B,), jnp.float32, 0.0, 3.0)
    yy = jnp.linspace(0.0, 1.0, H, dtype=jnp.float32)[:, None]
    xx = jnp.linspace(0.0, 1.0, W, dtype=jnp.float32)[None, :]
    depth = (2.5
             + slope[:, 0, None, None] * xx
             + slope[:, 1, None, None] * yy
             + 0.3 * jnp.sin(4.0 * xx + 3.0 * yy + phase[:, None, None]))
    depth = depth[:, None, :, :].astype(jnp.float32)            # (B, 1, H, W)

    # Deterministic per-batch camera intrinsics -> invK.
    scales = 1.0 + 0.1 * jax.random.uniform(k_scale, (B,), jnp.float32)
    Ks = []
    for i in range(B):
        fx = W * 1.2 * scales[i]
        fy = H * 1.1 * scales[i]
        Ks.append(jnp.array([[fx, 0.0, W / 2.0, 0.0],
                             [0.0, fy, H / 2.0, 0.0],
                             [0.0, 0.0, 1.0, 0.0],
                             [0.0, 0.0, 0.0, 1.0]], jnp.float32))
    K_b44 = jnp.stack(Ks, 0)
    invK_b44 = jnp.linalg.inv(K_b44)

    out = normal_generator(depth, invK_b44)
    out = jax.block_until_ready(out)

    ref = _reference(depth, invK_b44)
    assert out.shape == (B, 3, H, W)
    assert bool(jnp.allclose(out, ref, atol=2e-4, rtol=2e-4)), "mismatch vs reference"

    print("KERNEL_OK")
</pallas_src>

<mosaic_0001>
module attributes {stable_mosaic.version = 11 : i64} {
  func.func @_normal_kernel(%arg0: i32, %arg1: memref<2x16x128xf32, #tpu.memory_space<vmem>>, %arg2: memref<18xf32, #tpu.memory_space<smem>>, %arg3: memref<2x3x16x128xf32, #tpu.memory_space<vmem>>) attributes {dimension_semantics = [#tpu.dimension_semantics<parallel>], iteration_bounds = array<i64: 1>, scalar_prefetch = 0 : i64, scratch_operands = 0 : i64, tpu.core_type = #tpu.core_type<tc>, window_params = [{transform_indices = @transform_0, window_bounds = array<i64: 2, 16, 128>}, {transform_indices = @transform_1, window_bounds = array<i64: 18>}, {transform_indices = @transform_2, window_bounds = array<i64: 2, 3, 16, 128>}]} {
    %0 = tpu.iota {dimensions = array<i32: 0>} : vector<16x1xi32>
    %1 = tpu.iota {dimensions = array<i32: 1>} : vector<1x128xi32>
    %c0_i32 = arith.constant 0 : i32
    %2 = vector.broadcast %c0_i32 : i32 to vector<16x1xi32>
    %3 = arith.cmpi eq, %0, %2 : vector<16x1xi32>
    %c15_i32 = arith.constant 15 : i32
    %4 = vector.broadcast %c15_i32 : i32 to vector<16x1xi32>
    %5 = arith.cmpi eq, %0, %4 : vector<16x1xi32>
    %c0_i32_0 = arith.constant 0 : i32
    %6 = vector.broadcast %c0_i32_0 : i32 to vector<1x128xi32>
    %7 = arith.cmpi eq, %1, %6 : vector<1x128xi32>
    %c127_i32 = arith.constant 127 : i32
    %8 = vector.broadcast %c127_i32 : i32 to vector<1x128xi32>
    %9 = arith.cmpi sge, %1, %8 : vector<1x128xi32>
    %10 = arith.sitofp %0 : vector<16x1xi32> to vector<16x1xf32>
    %cst = arith.constant 5.000000e-01 : f32
    %11 = vector.broadcast %cst : f32 to vector<16x1xf32>
    %12 = arith.addf %10, %11 : vector<16x1xf32>
    %13 = arith.sitofp %1 : vector<1x128xi32> to vector<1x128xf32>
    %cst_1 = arith.constant 5.000000e-01 : f32
    %14 = vector.broadcast %cst_1 : f32 to vector<1x128xf32>
    %15 = arith.addf %13, %14 : vector<1x128xf32>
    %c0 = arith.constant 0 : index
    %c0_2 = arith.constant 0 : index
    %c0_3 = arith.constant 0 : index
    %16 = vector.load %arg1[%c0, %c0_2, %c0_3] : memref<2x16x128xf32, #tpu.memory_space<vmem>>, vector<1x16x128xf32>
    %17 = vector.shape_cast %16 : vector<1x16x128xf32> to vector<16x128xf32>
    %c2_i32 = arith.constant 2 : i32
    %18 = arith.muli %arg0, %c2_i32 : i32
    %c0_i32_4 = arith.constant 0 : i32
    %19 = arith.addi %18, %c0_i32_4 : i32
    %c9_i32 = arith.constant 9 : i32
    %20 = arith.muli %19, %c9_i32 : i32
    %c0_i32_5 = arith.constant 0 : i32
    %21 = arith.addi %20, %c0_i32_5 : i32
    %c0_i32_6 = arith.constant 0 : i32
    %22 = arith.addi %21, %c0_i32_6 : i32
    %23 = arith.index_cast %22 : i32 to index
    %24 = memref.load %arg2[%23] : memref<18xf32, #tpu.memory_space<smem>>
    %c1_i32 = arith.constant 1 : i32
    %25 = arith.addi %21, %c1_i32 : i32
    %26 = arith.index_cast %25 : i32 to index
    %27 = memref.load %arg2[%26] : memref<18xf32, #tpu.memory_space<smem>>
    %c2_i32_7 = arith.constant 2 : i32
    %28 = arith.addi %21, %c2_i32_7 : i32
    %29 = arith.index_cast %28 : i32 to index
    %30 = memref.load %arg2[%29] : memref<18xf32, #tpu.memory_space<smem>>
    %31 = vector.broadcast %24 : f32 to vector<1x128xf32>
    %32 = arith.mulf %31, %15 : vector<1x128xf32>
    %33 = vector.broadcast %27 : f32 to vector<16x1xf32>
    %34 = arith.mulf %33, %12 : vector<16x1xf32>
    %35 = vector.broadcast %30 : f32 to vector<16x1xf32>
    %36 = arith.addf %34, %35 : vector<16x1xf32>
    %37 = vector.broadcast %32 : vector<1x128xf32> to vector<16x128xf32>
    %38 = vector.broadcast %36 : vector<16x1xf32> to vector<16x128xf32>
    %39 = arith.addf %37, %38 : vector<16x128xf32>
    %40 = arith.mulf %17, %39 : vector<16x128xf32>
    %41 = arith.addf %40, %40 : vector<16x128xf32>
    %c1_i32_8 = arith.constant 1 : i32
    %42 = tpu.dynamic_rotate %40 by %c1_i32_8 dim 0 : vector<16x128xf32>, i32 -> vector<16x128xf32>
    %43 = vector.shape_cast %3 : vector<16x1xi1> to vector<16x1xi1>
    %44 = vector.broadcast %43 : vector<16x1xi1> to vector<16x128xi1>
    %45 = arith.select %44, %40, %42 : vector<16x128xi1>, vector<16x128xf32>
    %46 = arith.addf %45, %41 : vector<16x128xf32>
    %c15_i32_9 = arith.constant 15 : i32
    %47 = tpu.dynamic_rotate %40 by %c15_i32_9 dim 0 : vector<16x128xf32>, i32 -> vector<16x128xf32>
    %48 = vector.shape_cast %5 : vector<16x1xi1> to vector<16x1xi1>
    %49 = vector.broadcast %48 : vector<16x1xi1> to vector<16x128xi1>
    %50 = arith.select %49, %40, %47 : vector<16x128xi1>, vector<16x128xf32>
    %51 = arith.addf %46, %50 : vector<16x128xf32>
    %c1_i32_10 = arith.constant 1 : i32
    %52 = tpu.dynamic_rotate %40 by %c1_i32_10 dim 1 : vector<16x128xf32>, i32 -> vector<16x128xf32>
    %53 = vector.shape_cast %7 : vector<1x128xi1> to vector<1x128xi1>
    %54 = vector.broadcast %53 : vector<1x128xi1> to vector<16x128xi1>
    %55 = arith.select %54, %40, %52 : vector<16x128xi1>, vector<16x128xf32>
    %56 = arith.addf %55, %41 : vector<16x128xf32>
    %c127_i32_11 = arith.constant 127 : i32
    %57 = tpu.dynamic_rotate %40 by %c127_i32_11 dim 1 : vector<16x128xf32>, i32 -> vector<16x128xf32>
    %58 = vector.shape_cast %9 : vector<1x128xi1> to vector<1x128xi1>
    %59 = vector.broadcast %58 : vector<1x128xi1> to vector<16x128xi1>
    %60 = arith.select %59, %40, %57 : vector<16x128xi1>, vector<16x128xf32>
    %61 = arith.addf %56, %60 : vector<16x128xf32>
    %c127_i32_12 = arith.constant 127 : i32
    %62 = tpu.dynamic_rotate %51 by %c127_i32_12 dim 1 : vector<16x128xf32>, i32 -> vector<16x128xf32>
    %63 = vector.shape_cast %9 : vector<1x128xi1> to vector<1x128xi1>
    %64 = vector.broadcast %63 : vector<1x128xi1> to vector<16x128xi1>
    %65 = arith.select %64, %51, %62 : vector<16x128xi1>, vector<16x128xf32>
    %c1_i32_13 = arith.constant 1 : i32
    %66 = tpu.dynamic_rotate %51 by %c1_i32_13 dim 1 : vector<16x128xf32>, i32 -> vector<16x128xf32>
    %67 = vector.shape_cast %7 : vector<1x128xi1> to vector<1x128xi1>
    %68 = vector.broadcast %67 : vector<1x128xi1> to vector<16x128xi1>
    %69 = arith.select %68, %51, %66 : vector<16x128xi1>, vector<16x128xf32>
    %70 = arith.subf %65, %69 : vector<16x128xf32>
    %c15_i32_14 = arith.constant 15 : i32
    %71 = tpu.dynamic_rotate %61 by %c15_i32_14 dim 0 : vector<16x128xf32>, i32 -> vector<16x128xf32>
    %72 = vector.shape_cast %5 : vector<16x1xi1> to vector<16x1xi1>
    %73 = vector.broadcast %72 : vector<16x1xi1> to vector<16x128xi1>
    %74 = arith.select %73, %61, %71 : vector<16x128xi1>, vector<16x128xf32>
    %c1_i32_15 = arith.constant 1 : i32
    %75 = tpu.dynamic_rotate %61 by %c1_i32_15 dim 0 : vector<16x128xf32>, i32 -> vector<16x128xf32>
    %76 = vector.shape_cast %3 : vector<16x1xi1> to vector<16x1xi1>
    %77 = vector.broadcast %76 : vector<16x1xi1> to vector<16x128xi1>
    %78 = arith.select %77, %61, %75 : vector<16x128xi1>, vector<16x128xf32>
    %79 = arith.subf %74, %78 : vector<16x128xf32>
    %c2_i32_16 = arith.constant 2 : i32
    %80 = arith.muli %arg0, %c2_i32_16 : i32
    %c0_i32_17 = arith.constant 0 : i32
    %81 = arith.addi %80, %c0_i32_17 : i32
    %c9_i32_18 = arith.constant 9 : i32
    %82 = arith.muli %81, %c9_i32_18 : i32
    %c3_i32 = arith.constant 3 : i32
    %83 = arith.addi %82, %c3_i32 : i32
    %c0_i32_19 = arith.constant 0 : i32
    %84 = arith.addi %83, %c0_i32_19 : i32
    %85 = arith.index_cast %84 : i32 to index
    %86 = memref.load %arg2[%85] : memref<18xf32, #tpu.memory_space<smem>>
    %c1_i32_20 = arith.constant 1 : i32
    %87 = arith.addi %83, %c1_i32_20 : i32
    %88 = arith.index_cast %87 : i32 to index
    %89 = memref.load %arg2[%88] : memref<18xf32, #tpu.memory_space<smem>>
    %c2_i32_21 = arith.constant 2 : i32
    %90 = arith.addi %83, %c2_i32_21 : i32
    %91 = arith.index_cast %90 : i32 to index
    %92 = memref.load %arg2[%91] : memref<18xf32, #tpu.memory_space<smem>>
    %93 = vector.broadcast %86 : f32 to vector<1x128xf32>
    %94 = arith.mulf %93, %15 : vector<1x128xf32>
    %95 = vector.broadcast %89 : f32 to vector<16x1xf32>
    %96 = arith.mulf %95, %12 : vector<16x1xf32>
    %97 = vector.broadcast %92 : f32 to vector<16x1xf32>
    %98 = arith.addf %96, %97 : vector<16x1xf32>
    %99 = vector.broadcast %94 : vector<1x128xf32> to vector<16x128xf32>
    %100 = vector.broadcast %98 : vector<16x1xf32> to vector<16x128xf32>
    %101 = arith.addf %99, %100 : vector<16x128xf32>
    %102 = arith.mulf %17, %101 : vector<16x128xf32>
    %103 = arith.addf %102, %102 : vector<16x128xf32>
    %c1_i32_22 = arith.constant 1 : i32
    %104 = tpu.dynamic_rotate %102 by %c1_i32_22 dim 0 : vector<16x128xf32>, i32 -> vector<16x128xf32>
    %105 = vector.shape_cast %3 : vector<16x1xi1> to vector<16x1xi1>
    %106 = vector.broadcast %105 : vector<16x1xi1> to vector<16x128xi1>
    %107 = arith.select %106, %102, %104 : vector<16x128xi1>, vector<16x128xf32>
    %108 = arith.addf %107, %103 : vector<16x128xf32>
    %c15_i32_23 = arith.constant 15 : i32
    %109 = tpu.dynamic_rotate %102 by %c15_i32_23 dim 0 : vector<16x128xf32>, i32 -> vector<16x128xf32>
    %110 = vector.shape_cast %5 : vector<16x1xi1> to vector<16x1xi1>
    %111 = vector.broadcast %110 : vector<16x1xi1> to vector<16x128xi1>
    %112 = arith.select %111, %102, %109 : vector<16x128xi1>, vector<16x128xf32>
    %113 = arith.addf %108, %112 : vector<16x128xf32>
    %c1_i32_24 = arith.constant 1 : i32
    %114 = tpu.dynamic_rotate %102 by %c1_i32_24 dim 1 : vector<16x128xf32>, i32 -> vector<16x128xf32>
    %115 = vector.shape_cast %7 : vector<1x128xi1> to vector<1x128xi1>
    %116 = vector.broadcast %115 : vector<1x128xi1> to vector<16x128xi1>
    %117 = arith.select %116, %102, %114 : vector<16x128xi1>, vector<16x128xf32>
    %118 = arith.addf %117, %103 : vector<16x128xf32>
    %c127_i32_25 = arith.constant 127 : i32
    %119 = tpu.dynamic_rotate %102 by %c127_i32_25 dim 1 : vector<16x128xf32>, i32 -> vector<16x128xf32>
    %120 = vector.shape_cast %9 : vector<1x128xi1> to vector<1x128xi1>
    %121 = vector.broadcast %120 : vector<1x128xi1> to vector<16x128xi1>
    %122 = arith.select %121, %102, %119 : vector<16x128xi1>, vector<16x128xf32>
    %123 = arith.addf %118, %122 : vector<16x128xf32>
    %c127_i32_26 = arith.constant 127 : i32
    %124 = tpu.dynamic_rotate %113 by %c127_i32_26 dim 1 : vector<16x128xf32>, i32 -> vector<16x128xf32>
    %125 = vector.shape_cast %9 : vector<1x128xi1> to vector<1x128xi1>
    %126 = vector.broadcast %125 : vector<1x128xi1> to vector<16x128xi1>
    %127 = arith.select %126, %113, %124 : vector<16x128xi1>, vector<16x128xf32>
    %c1_i32_27 = arith.constant 1 : i32
    %128 = tpu.dynamic_rotate %113 by %c1_i32_27 dim 1 : vector<16x128xf32>, i32 -> vector<16x128xf32>
    %129 = vector.shape_cast %7 : vector<1x128xi1> to vector<1x128xi1>
    %130 = vector.broadcast %129 : vector<1x128xi1> to vector<16x128xi1>
    %131 = arith.select %130, %113, %128 : vector<16x128xi1>, vector<16x128xf32>
    %132 = arith.subf %127, %131 : vector<16x128xf32>
    %c15_i32_28 = arith.constant 15 : i32
    %133 = tpu.dynamic_rotate %123 by %c15_i32_28 dim 0 : vector<16x128xf32>, i32 -> vector<16x128xf32>
    %134 = vector.shape_cast %5 : vector<16x1xi1> to vector<16x1xi1>
    %135 = vector.broadcast %134 : vector<16x1xi1> to vector<16x128xi1>
    %136 = arith.select %135, %123, %133 : vector<16x128xi1>, vector<16x128xf32>
    %c1_i32_29 = arith.constant 1 : i32
    %137 = tpu.dynamic_rotate %123 by %c1_i32_29 dim 0 : vector<16x128xf32>, i32 -> vector<16x128xf32>
    %138 = vector.shape_cast %3 : vector<16x1xi1> to vector<16x1xi1>
    %139 = vector.broadcast %138 : vector<16x1xi1> to vector<16x128xi1>
    %140 = arith.select %139, %123, %137 : vector<16x128xi1>, vector<16x128xf32>
    %141 = arith.subf %136, %140 : vector<16x128xf32>
    %c2_i32_30 = arith.constant 2 : i32
    %142 = arith.muli %arg0, %c2_i32_30 : i32
    %c0_i32_31 = arith.constant 0 : i32
    %143 = arith.addi %142, %c0_i32_31 : i32
    %c9_i32_32 = arith.constant 9 : i32
    %144 = arith.muli %143, %c9_i32_32 : i32
    %c6_i32 = arith.constant 6 : i32
    %145 = arith.addi %144, %c6_i32 : i32
    %c0_i32_33 = arith.constant 0 : i32
    %146 = arith.addi %145, %c0_i32_33 : i32
    %147 = arith.index_cast %146 : i32 to index
    %148 = memref.load %arg2[%147] : memref<18xf32, #tpu.memory_space<smem>>
    %c1_i32_34 = arith.constant 1 : i32
    %149 = arith.addi %145, %c1_i32_34 : i32
    %150 = arith.index_cast %149 : i32 to index
    %151 = memref.load %arg2[%150] : memref<18xf32, #tpu.memory_space<smem>>
    %c2_i32_35 = arith.constant 2 : i32
    %152 = arith.addi %145, %c2_i32_35 : i32
    %153 = arith.index_cast %152 : i32 to index
    %154 = memref.load %arg2[%153] : memref<18xf32, #tpu.memory_space<smem>>
    %155 = vector.broadcast %148 : f32 to vector<1x128xf32>
    %156 = arith.mulf %155, %15 : vector<1x128xf32>
    %157 = vector.broadcast %151 : f32 to vector<16x1xf32>
    %158 = arith.mulf %157, %12 : vector<16x1xf32>
    %159 = vector.broadcast %154 : f32 to vector<16x1xf32>
    %160 = arith.addf %158, %159 : vector<16x1xf32>
    %161 = vector.broadcast %156 : vector<1x128xf32> to vector<16x128xf32>
    %162 = vector.broadcast %160 : vector<16x1xf32> to vector<16x128xf32>
    %163 = arith.addf %161, %162 : vector<16x128xf32>
    %164 = arith.mulf %17, %163 : vector<16x128xf32>
    %165 = arith.addf %164, %164 : vector<16x128xf32>
    %c1_i32_36 = arith.constant 1 : i32
    %166 = tpu.dynamic_rotate %164 by %c1_i32_36 dim 0 : vector<16x128xf32>, i32 -> vector<16x128xf32>
    %167 = vector.shape_cast %3 : vector<16x1xi1> to vector<16x1xi1>
    %168 = vector.broadcast %167 : vector<16x1xi1> to vector<16x128xi1>
    %169 = arith.select %168, %164, %166 : vector<16x128xi1>, vector<16x128xf32>
    %170 = arith.addf %169, %165 : vector<16x128xf32>
    %c15_i32_37 = arith.constant 15 : i32
    %171 = tpu.dynamic_rotate %164 by %c15_i32_37 dim 0 : vector<16x128xf32>, i32 -> vector<16x128xf32>
    %172 = vector.shape_cast %5 : vector<16x1xi1> to vector<16x1xi1>
    %173 = vector.broadcast %172 : vector<16x1xi1> to vector<16x128xi1>
    %174 = arith.select %173, %164, %171 : vector<16x128xi1>, vector<16x128xf32>
    %175 = arith.addf %170, %174 : vector<16x128xf32>
    %c1_i32_38 = arith.constant 1 : i32
    %176 = tpu.dynamic_rotate %164 by %c1_i32_38 dim 1 : vector<16x128xf32>, i32 -> vector<16x128xf32>
    %177 = vector.shape_cast %7 : vector<1x128xi1> to vector<1x128xi1>
    %178 = vector.broadcast %177 : vector<1x128xi1> to vector<16x128xi1>
    %179 = arith.select %178, %164, %176 : vector<16x128xi1>, vector<16x128xf32>
    %180 = arith.addf %179, %165 : vector<16x128xf32>
    %c127_i32_39 = arith.constant 127 : i32
    %181 = tpu.dynamic_rotate %164 by %c127_i32_39 dim 1 : vector<16x128xf32>, i32 -> vector<16x128xf32>
    %182 = vector.shape_cast %9 : vector<1x128xi1> to vector<1x128xi1>
    %183 = vector.broadcast %182 : vector<1x128xi1> to vector<16x128xi1>
    %184 = arith.select %183, %164, %181 : vector<16x128xi1>, vector<16x128xf32>
    %185 = arith.addf %180, %184 : vector<16x128xf32>
    %c127_i32_40 = arith.constant 127 : i32
    %186 = tpu.dynamic_rotate %175 by %c127_i32_40 dim 1 : vector<16x128xf32>, i32 -> vector<16x128xf32>
    %187 = vector.shape_cast %9 : vector<1x128xi1> to vector<1x128xi1>
    %188 = vector.broadcast %187 : vector<1x128xi1> to vector<16x128xi1>
    %189 = arith.select %188, %175, %186 : vector<16x128xi1>, vector<16x128xf32>
    %c1_i32_41 = arith.constant 1 : i32
    %190 = tpu.dynamic_rotate %175 by %c1_i32_41 dim 1 : vector<16x128xf32>, i32 -> vector<16x128xf32>
    %191 = vector.shape_cast %7 : vector<1x128xi1> to vector<1x128xi1>
    %192 = vector.broadcast %191 : vector<1x128xi1> to vector<16x128xi1>
    %193 = arith.select %192, %175, %190 : vector<16x128xi1>, vector<16x128xf32>
    %194 = arith.subf %189, %193 : vector<16x128xf32>
    %c15_i32_42 = arith.constant 15 : i32
    %195 = tpu.dynamic_rotate %185 by %c15_i32_42 dim 0 : vector<16x128xf32>, i32 -> vector<16x128xf32>
    %196 = vector.shape_cast %5 : vector<16x1xi1> to vector<16x1xi1>
    %197 = vector.broadcast %196 : vector<16x1xi1> to vector<16x128xi1>
    %198 = arith.select %197, %185, %195 : vector<16x128xi1>, vector<16x128xf32>
    %c1_i32_43 = arith.constant 1 : i32
    %199 = tpu.dynamic_rotate %185 by %c1_i32_43 dim 0 : vector<16x128xf32>, i32 -> vector<16x128xf32>
    %200 = vector.shape_cast %3 : vector<16x1xi1> to vector<16x1xi1>
    %201 = vector.broadcast %200 : vector<16x1xi1> to vector<16x128xi1>
    %202 = arith.select %201, %185, %199 : vector<16x128xi1>, vector<16x128xf32>
    %203 = arith.subf %198, %202 : vector<16x128xf32>
    %204 = arith.mulf %132, %203 : vector<16x128xf32>
    %205 = arith.mulf %194, %141 : vector<16x128xf32>
    %206 = arith.subf %204, %205 : vector<16x128xf32>
    %207 = arith.mulf %194, %79 : vector<16x128xf32>
    %208 = arith.mulf %70, %203 : vector<16x128xf32>
    %209 = arith.subf %207, %208 : vector<16x128xf32>
    %210 = arith.mulf %70, %141 : vector<16x128xf32>
    %211 = arith.mulf %132, %79 : vector<16x128xf32>
    %212 = arith.subf %210, %211 : vector<16x128xf32>
    %213 = arith.mulf %206, %206 : vector<16x128xf32>
    %214 = arith.mulf %209, %209 : vector<16x128xf32>
    %215 = arith.addf %213, %214 : vector<16x128xf32>
    %216 = arith.mulf %212, %212 : vector<16x128xf32>
    %217 = arith.addf %215, %216 : vector<16x128xf32>
    %cst_44 = arith.constant 1.000000e-24 : f32
    %218 = vector.broadcast %cst_44 : f32 to vector<16x128xf32>
    %219 = arith.maximumf %217, %218 : vector<16x128xf32>
    %220 = math.rsqrt %219 : vector<16x128xf32>
    %221 = arith.mulf %206, %220 : vector<16x128xf32>
    %c0_45 = arith.constant 0 : index
    %c0_46 = arith.constant 0 : index
    %c0_47 = arith.constant 0 : index
    %c0_48 = arith.constant 0 : index
    %222 = vector.load %arg3[%c0_45, %c0_46, %c0_47, %c0_48] : memref<2x3x16x128xf32, #tpu.memory_space<vmem>>, vector<1x1x16x128xf32>
    %223 = vector.shape_cast %222 : vector<1x1x16x128xf32> to vector<16x128xf32>
    %224 = vector.shape_cast %221 : vector<16x128xf32> to vector<1x1x16x128xf32>
    tpu.vector_store %arg3[%c0_45, %c0_46, %c0_47, %c0_48], %224 {strides = array<i32>} : memref<2x3x16x128xf32, #tpu.memory_space<vmem>>, vector<1x1x16x128xf32>,
    %225 = arith.mulf %209, %220 : vector<16x128xf32>
    %c0_49 = arith.constant 0 : index
    %c1 = arith.constant 1 : index
    %c0_50 = arith.constant 0 : index
    %c0_51 = arith.constant 0 : index
    %226 = vector.load %arg3[%c0_49, %c1, %c0_50, %c0_51] : memref<2x3x16x128xf32, #tpu.memory_space<vmem>>, vector<1x1x16x128xf32>
    %227 = vector.shape_cast %226 : vector<1x1x16x128xf32> to vector<16x128xf32>
    %228 = vector.shape_cast %225 : vector<16x128xf32> to vector<1x1x16x128xf32>
    tpu.vector_store %arg3[%c0_49, %c1, %c0_50, %c0_51], %228 {strides = array<i32>} : memref<2x3x16x128xf32, #tpu.memory_space<vmem>>, vector<1x1x16x128xf32>,
    %229 = arith.mulf %212, %220 : vector<16x128xf32>
    %c0_52 = arith.constant 0 : index
    %c2 = arith.constant 2 : index
    %c0_53 = arith.constant 0 : index
    %c0_54 = arith.constant 0 : index
    %230 = vector.load %arg3[%c0_52, %c2, %c0_53, %c0_54] : memref<2x3x16x128xf32, #tpu.memory_space<vmem>>, vector<1x1x16x128xf32>
    %231 = vector.shape_cast %230 : vector<1x1x16x128xf32> to vector<16x128xf32>
    %232 = vector.shape_cast %229 : vector<16x128xf32> to vector<1x1x16x128xf32>
    tpu.vector_store %arg3[%c0_52, %c2, %c0_53, %c0_54], %232 {strides = array<i32>} : memref<2x3x16x128xf32, #tpu.memory_space<vmem>>, vector<1x1x16x128xf32>,
    %c1_55 = arith.constant 1 : index
    %c0_56 = arith.constant 0 : index
    %c0_57 = arith.constant 0 : index
    %233 = vector.load %arg1[%c1_55, %c0_56, %c0_57] : memref<2x16x128xf32, #tpu.memory_space<vmem>>, vector<1x16x128xf32>
    %234 = vector.shape_cast %233 : vector<1x16x128xf32> to vector<16x128xf32>
    %c2_i32_58 = arith.constant 2 : i32
    %235 = arith.muli %arg0, %c2_i32_58 : i32
    %c1_i32_59 = arith.constant 1 : i32
    %236 = arith.addi %235, %c1_i32_59 : i32
    %c9_i32_60 = arith.constant 9 : i32
    %237 = arith.muli %236, %c9_i32_60 : i32
    %c0_i32_61 = arith.constant 0 : i32
    %238 = arith.addi %237, %c0_i32_61 : i32
    %c0_i32_62 = arith.constant 0 : i32
    %239 = arith.addi %238, %c0_i32_62 : i32
    %240 = arith.index_cast %239 : i32 to index
    %241 = memref.load %arg2[%240] : memref<18xf32, #tpu.memory_space<smem>>
    %c1_i32_63 = arith.constant 1 : i32
    %242 = arith.addi %238, %c1_i32_63 : i32
    %243 = arith.index_cast %242 : i32 to index
    %244 = memref.load %arg2[%243] : memref<18xf32, #tpu.memory_space<smem>>
    %c2_i32_64 = arith.constant 2 : i32
    %245 = arith.addi %238, %c2_i32_64 : i32
    %246 = arith.index_cast %245 : i32 to index
    %247 = memref.load %arg2[%246] : memref<18xf32, #tpu.memory_space<smem>>
    %248 = vector.broadcast %241 : f32 to vector<1x128xf32>
    %249 = arith.mulf %248, %15 : vector<1x128xf32>
    %250 = vector.broadcast %244 : f32 to vector<16x1xf32>
    %251 = arith.mulf %250, %12 : vector<16x1xf32>
    %252 = vector.broadcast %247 : f32 to vector<16x1xf32>
    %253 = arith.addf %251, %252 : vector<16x1xf32>
    %254 = vector.broadcast %249 : vector<1x128xf32> to vector<16x128xf32>
    %255 = vector.broadcast %253 : vector<16x1xf32> to vector<16x128xf32>
    %256 = arith.addf %254, %255 : vector<16x128xf32>
    %257 = arith.mulf %234, %256 : vector<16x128xf32>
    %258 = arith.addf %257, %257 : vector<16x128xf32>
    %c1_i32_65 = arith.constant 1 : i32
    %259 = tpu.dynamic_rotate %257 by %c1_i32_65 dim 0 : vector<16x128xf32>, i32 -> vector<16x128xf32>
    %260 = vector.shape_cast %3 : vector<16x1xi1> to vector<16x1xi1>
    %261 = vector.broadcast %260 : vector<16x1xi1> to vector<16x128xi1>
    %262 = arith.select %261, %257, %259 : vector<16x128xi1>, vector<16x128xf32>
    %263 = arith.addf %262, %258 : vector<16x128xf32>
    %c15_i32_66 = arith.constant 15 : i32
    %264 = tpu.dynamic_rotate %257 by %c15_i32_66 dim 0 : vector<16x128xf32>, i32 -> vector<16x128xf32>
    %265 = vector.shape_cast %5 : vector<16x1xi1> to vector<16x1xi1>
    %266 = vector.broadcast %265 : vector<16x1xi1> to vector<16x128xi1>
    %267 = arith.select %266, %257, %264 : vector<16x128xi1>, vector<16x128xf32>
    %268 = arith.addf %263, %267 : vector<16x128xf32>
    %c1_i32_67 = arith.constant 1 : i32
    %269 = tpu.dynamic_rotate %257 by %c1_i32_67 dim 1 : vector<16x128xf32>, i32 -> vector<16x128xf32>
    %270 = vector.shape_cast %7 : vector<1x128xi1> to vector<1x128xi1>
    %271 = vector.broadcast %270 : vector<1x128xi1> to vector<16x128xi1>
    %272 = arith.select %271, %257, %269 : vector<16x128xi1>, vector<16x128xf32>
    %273 = arith.addf %272, %258 : vector<16x128xf32>
    %c127_i32_68 = arith.constant 127 : i32
    %274 = tpu.dynamic_rotate %257 by %c127_i32_68 dim 1 : vector<16x128xf32>, i32 -> vector<16x128xf32>
    %275 = vector.shape_cast %9 : vector<1x128xi1> to vector<1x128xi1>
    %276 = vector.broadcast %275 : vector<1x128xi1> to vector<16x128xi1>
    %277 = arith.select %276, %257, %274 : vector<16x128xi1>, vector<16x128xf32>
    %278 = arith.addf %273, %277 : vector<16x128xf32>
    %c127_i32_69 = arith.constant 127 : i32
    %279 = tpu.dynamic_rotate %268 by %c127_i32_69 dim 1 : vector<16x128xf32>, i32 -> vector<16x128xf32>
    %280 = vector.shape_cast %9 : vector<1x128xi1> to vector<1x128xi1>
    %281 = vector.broadcast %280 : vector<1x128xi1> to vector<16x128xi1>
    %282 = arith.select %281, %268, %279 : vector<16x128xi1>, vector<16x128xf32>
    %c1_i32_70 = arith.constant 1 : i32
    %283 = tpu.dynamic_rotate %268 by %c1_i32_70 dim 1 : vector<16x128xf32>, i32 -> vector<16x128xf32>
    %284 = vector.shape_cast %7 : vector<1x128xi1> to vector<1x128xi1>
    %285 = vector.broadcast %284 : vector<1x128xi1> to vector<16x128xi1>
    %286 = arith.select %285, %268, %283 : vector<16x128xi1>, vector<16x128xf32>
    %287 = arith.subf %282, %286 : vector<16x128xf32>
    %c15_i32_71 = arith.constant 15 : i32
    %288 = tpu.dynamic_rotate %278 by %c15_i32_71 dim 0 : vector<16x128xf32>, i32 -> vector<16x128xf32>
    %289 = vector.shape_cast %5 : vector<16x1xi1> to vector<16x1xi1>
    %290 = vector.broadcast %289 : vector<16x1xi1> to vector<16x128xi1>
    %291 = arith.select %290, %278, %288 : vector<16x128xi1>, vector<16x128xf32>
    %c1_i32_72 = arith.constant 1 : i32
    %292 = tpu.dynamic_rotate %278 by %c1_i32_72 dim 0 : vector<16x128xf32>, i32 -> vector<16x128xf32>
    %293 = vector.shape_cast %3 : vector<16x1xi1> to vector<16x1xi1>
    %294 = vector.broadcast %293 : vector<16x1xi1> to vector<16x128xi1>
    %295 = arith.select %294, %278, %292 : vector<16x128xi1>, vector<16x128xf32>
    %296 = arith.subf %291, %295 : vector<16x128xf32>
    %c2_i32_73 = arith.constant 2 : i32
    %297 = arith.muli %arg0, %c2_i32_73 : i32
    %c1_i32_74 = arith.constant 1 : i32
    %298 = arith.addi %297, %c1_i32_74 : i32
    %c9_i32_75 = arith.constant 9 : i32
    %299 = arith.muli %298, %c9_i32_75 : i32
    %c3_i32_76 = arith.constant 3 : i32
    %300 = arith.addi %299, %c3_i32_76 : i32
    %c0_i32_77 = arith.constant 0 : i32
    %301 = arith.addi %300, %c0_i32_77 : i32
    %302 = arith.index_cast %301 : i32 to index
    %303 = memref.load %arg2[%302] : memref<18xf32, #tpu.memory_space<smem>>
    %c1_i32_78 = arith.constant 1 : i32
    %304 = arith.addi %300, %c1_i32_78 : i32
    %305 = arith.index_cast %304 : i32 to index
    %306 = memref.load %arg2[%305] : memref<18xf32, #tpu.memory_space<smem>>
    %c2_i32_79 = arith.constant 2 : i32
    %307 = arith.addi %300, %c2_i32_79 : i32
    %308 = arith.index_cast %307 : i32 to index
    %309 = memref.load %arg2[%308] : memref<18xf32, #tpu.memory_space<smem>>
    %310 = vector.broadcast %303 : f32 to vector<1x128xf32>
    %311 = arith.mulf %310, %15 : vector<1x128xf32>
    %312 = vector.broadcast %306 : f32 to vector<16x1xf32>
    %313 = arith.mulf %312, %12 : vector<16x1xf32>
    %314 = vector.broadcast %309 : f32 to vector<16x1xf32>
    %315 = arith.addf %313, %314 : vector<16x1xf32>
    %316 = vector.broadcast %311 : vector<1x128xf32> to vector<16x128xf32>
    %317 = vector.broadcast %315 : vector<16x1xf32> to vector<16x128xf32>
    %318 = arith.addf %316, %317 : vector<16x128xf32>
    %319 = arith.mulf %234, %318 : vector<16x128xf32>
    %320 = arith.addf %319, %319 : vector<16x128xf32>
    %c1_i32_80 = arith.constant 1 : i32
    %321 = tpu.dynamic_rotate %319 by %c1_i32_80 dim 0 : vector<16x128xf32>, i32 -> vector<16x128xf32>
    %322 = vector.shape_cast %3 : vector<16x1xi1> to vector<16x1xi1>
    %323 = vector.broadcast %322 : vector<16x1xi1> to vector<16x128xi1>
    %324 = arith.select %323, %319, %321 : vector<16x128xi1>, vector<16x128xf32>
    %325 = arith.addf %324, %320 : vector<16x128xf32>
    %c15_i32_81 = arith.constant 15 : i32
    %326 = tpu.dynamic_rotate %319 by %c15_i32_81 dim 0 : vector<16x128xf32>, i32 -> vector<16x128xf32>
    %327 = vector.shape_cast %5 : vector<16x1xi1> to vector<16x1xi1>
    %328 = vector.broadcast %327 : vector<16x1xi1> to vector<16x128xi1>
    %329 = arith.select %328, %319, %326 : vector<16x128xi1>, vector<16x128xf32>
    %330 = arith.addf %325, %329 : vector<16x128xf32>
    %c1_i32_82 = arith.constant 1 : i32
    %331 = tpu.dynamic_rotate %319 by %c1_i32_82 dim 1 : vector<16x128xf32>, i32 -> vector<16x128xf32>
    %332 = vector.shape_cast %7 : vector<1x128xi1> to vector<1x128xi1>
    %333 = vector.broadcast %332 : vector<1x128xi1> to vector<16x128xi1>
    %334 = arith.select %333, %319, %331 : vector<16x128xi1>, vector<16x128xf32>
    %335 = arith.addf %334, %320 : vector<16x128xf32>
    %c127_i32_83 = arith.constant 127 : i32
    %336 = tpu.dynamic_rotate %319 by %c127_i32_83 dim 1 : vector<16x128xf32>, i32 -> vector<16x128xf32>
    %337 = vector.shape_cast %9 : vector<1x128xi1> to vector<1x128xi1>
    %338 = vector.broadcast %337 : vector<1x128xi1> to vector<16x128xi1>
    %339 = arith.select %338, %319, %336 : vector<16x128xi1>, vector<16x128xf32>
    %340 = arith.addf %335, %339 : vector<16x128xf32>
    %c127_i32_84 = arith.constant 127 : i32
    %341 = tpu.dynamic_rotate %330 by %c127_i32_84 dim 1 : vector<16x128xf32>, i32 -> vector<16x128xf32>
    %342 = vector.shape_cast %9 : vector<1x128xi1> to vector<1x128xi1>
    %343 = vector.broadcast %342 : vector<1x128xi1> to vector<16x128xi1>
    %344 = arith.select %343, %330, %341 : vector<16x128xi1>, vector<16x128xf32>
    %c1_i32_85 = arith.constant 1 : i32
    %345 = tpu.dynamic_rotate %330 by %c1_i32_85 dim 1 : vector<16x128xf32>, i32 -> vector<16x128xf32>
    %346 = vector.shape_cast %7 : vector<1x128xi1> to vector<1x128xi1>
    %347 = vector.broadcast %346 : vector<1x128xi1> to vector<16x128xi1>
    %348 = arith.select %347, %330, %345 : vector<16x128xi1>, vector<16x128xf32>
    %349 = arith.subf %344, %348 : vector<16x128xf32>
    %c15_i32_86 = arith.constant 15 : i32
    %350 = tpu.dynamic_rotate %340 by %c15_i32_86 dim 0 : vector<16x128xf32>, i32 -> vector<16x128xf32>
    %351 = vector.shape_cast %5 : vector<16x1xi1> to vector<16x1xi1>
    %352 = vector.broadcast %351 : vector<16x1xi1> to vector<16x128xi1>
    %353 = arith.select %352, %340, %350 : vector<16x128xi1>, vector<16x128xf32>
    %c1_i32_87 = arith.constant 1 : i32
    %354 = tpu.dynamic_rotate %340 by %c1_i32_87 dim 0 : vector<16x128xf32>, i32 -> vector<16x128xf32>
    %355 = vector.shape_cast %3 : vector<16x1xi1> to vector<16x1xi1>
    %356 = vector.broadcast %355 : vector<16x1xi1> to vector<16x128xi1>
    %357 = arith.select %356, %340, %354 : vector<16x128xi1>, vector<16x128xf32>
    %358 = arith.subf %353, %357 : vector<16x128xf32>
    %c2_i32_88 = arith.constant 2 : i32
    %359 = arith.muli %arg0, %c2_i32_88 : i32
    %c1_i32_89 = arith.constant 1 : i32
    %360 = arith.addi %359, %c1_i32_89 : i32
    %c9_i32_90 = arith.constant 9 : i32
    %361 = arith.muli %360, %c9_i32_90 : i32
    %c6_i32_91 = arith.constant 6 : i32
    %362 = arith.addi %361, %c6_i32_91 : i32
    %c0_i32_92 = arith.constant 0 : i32
    %363 = arith.addi %362, %c0_i32_92 : i32
    %364 = arith.index_cast %363 : i32 to index
    %365 = memref.load %arg2[%364] : memref<18xf32, #tpu.memory_space<smem>>
    %c1_i32_93 = arith.constant 1 : i32
    %366 = arith.addi %362, %c1_i32_93 : i32
    %367 = arith.index_cast %366 : i32 to index
    %368 = memref.load %arg2[%367] : memref<18xf32, #tpu.memory_space<smem>>
    %c2_i32_94 = arith.constant 2 : i32
    %369 = arith.addi %362, %c2_i32_94 : i32
    %370 = arith.index_cast %369 : i32 to index
    %371 = memref.load %arg2[%370] : memref<18xf32, #tpu.memory_space<smem>>
    %372 = vector.broadcast %365 : f32 to vector<1x128xf32>
    %373 = arith.mulf %372, %15 : vector<1x128xf32>
    %374 = vector.broadcast %368 : f32 to vector<16x1xf32>
    %375 = arith.mulf %374, %12 : vector<16x1xf32>
    %376 = vector.broadcast %371 : f32 to vector<16x1xf32>
    %377 = arith.addf %375, %376 : vector<16x1xf32>
    %378 = vector.broadcast %373 : vector<1x128xf32> to vector<16x128xf32>
    %379 = vector.broadcast %377 : vector<16x1xf32> to vector<16x128xf32>
    %380 = arith.addf %378, %379 : vector<16x128xf32>
    %381 = arith.mulf %234, %380 : vector<16x128xf32>
    %382 = arith.addf %381, %381 : vector<16x128xf32>
    %c1_i32_95 = arith.constant 1 : i32
    %383 = tpu.dynamic_rotate %381 by %c1_i32_95 dim 0 : vector<16x128xf32>, i32 -> vector<16x128xf32>
    %384 = vector.shape_cast %3 : vector<16x1xi1> to vector<16x1xi1>
    %385 = vector.broadcast %384 : vector<16x1xi1> to vector<16x128xi1>
    %386 = arith.select %385, %381, %383 : vector<16x128xi1>, vector<16x128xf32>
    %387 = arith.addf %386, %382 : vector<16x128xf32>
    %c15_i32_96 = arith.constant 15 : i32
    %388 = tpu.dynamic_rotate %381 by %c15_i32_96 dim 0 : vector<16x128xf32>, i32 -> vector<16x128xf32>
    %389 = vector.shape_cast %5 : vector<16x1xi1> to vector<16x1xi1>
    %390 = vector.broadcast %389 : vector<16x1xi1> to vector<16x128xi1>
    %391 = arith.select %390, %381, %388 : vector<16x128xi1>, vector<16x128xf32>
    %392 = arith.addf %387, %391 : vector<16x128xf32>
    %c1_i32_97 = arith.constant 1 : i32
    %393 = tpu.dynamic_rotate %381 by %c1_i32_97 dim 1 : vector<16x128xf32>, i32 -> vector<16x128xf32>
    %394 = vector.shape_cast %7 : vector<1x128xi1> to vector<1x128xi1>
    %395 = vector.broadcast %394 : vector<1x128xi1> to vector<16x128xi1>
    %396 = arith.select %395, %381, %393 : vector<16x128xi1>, vector<16x128xf32>
    %397 = arith.addf %396, %382 : vector<16x128xf32>
    %c127_i32_98 = arith.constant 127 : i32
    %398 = tpu.dynamic_rotate %381 by %c127_i32_98 dim 1 : vector<16x128xf32>, i32 -> vector<16x128xf32>
    %399 = vector.shape_cast %9 : vector<1x128xi1> to vector<1x128xi1>
    %400 = vector.broadcast %399 : vector<1x128xi1> to vector<16x128xi1>
    %401 = arith.select %400, %381, %398 : vector<16x128xi1>, vector<16x128xf32>
    %402 = arith.addf %397, %401 : vector<16x128xf32>
    %c127_i32_99 = arith.constant 127 : i32
    %403 = tpu.dynamic_rotate %392 by %c127_i32_99 dim 1 : vector<16x128xf32>, i32 -> vector<16x128xf32>
    %404 = vector.shape_cast %9 : vector<1x128xi1> to vector<1x128xi1>
    %405 = vector.broadcast %404 : vector<1x128xi1> to vector<16x128xi1>
    %406 = arith.select %405, %392, %403 : vector<16x128xi1>, vector<16x128xf32>
    %c1_i32_100 = arith.constant 1 : i32
    %407 = tpu.dynamic_rotate %392 by %c1_i32_100 dim 1 : vector<16x128xf32>, i32 -> vector<16x128xf32>
    %408 = vector.shape_cast %7 : vector<1x128xi1> to vector<1x128xi1>
    %409 = vector.broadcast %408 : vector<1x128xi1> to vector<16x128xi1>
    %410 = arith.select %409, %392, %407 : vector<16x128xi1>, vector<16x128xf32>
    %411 = arith.subf %406, %410 : vector<16x128xf32>
    %c15_i32_101 = arith.constant 15 : i32
    %412 = tpu.dynamic_rotate %402 by %c15_i32_101 dim 0 : vector<16x128xf32>, i32 -> vector<16x128xf32>
    %413 = vector.shape_cast %5 : vector<16x1xi1> to vector<16x1xi1>
    %414 = vector.broadcast %413 : vector<16x1xi1> to vector<16x128xi1>
    %415 = arith.select %414, %402, %412 : vector<16x128xi1>, vector<16x128xf32>
    %c1_i32_102 = arith.constant 1 : i32
    %416 = tpu.dynamic_rotate %402 by %c1_i32_102 dim 0 : vector<16x128xf32>, i32 -> vector<16x128xf32>
    %417 = vector.shape_cast %3 : vector<16x1xi1> to vector<16x1xi1>
    %418 = vector.broadcast %417 : vector<16x1xi1> to vector<16x128xi1>
    %419 = arith.select %418, %402, %416 : vector<16x128xi1>, vector<16x128xf32>
    %420 = arith.subf %415, %419 : vector<16x128xf32>
    %421 = arith.mulf %349, %420 : vector<16x128xf32>
    %422 = arith.mulf %411, %358 : vector<16x128xf32>
    %423 = arith.subf %421, %422 : vector<16x128xf32>
    %424 = arith.mulf %411, %296 : vector<16x128xf32>
    %425 = arith.mulf %287, %420 : vector<16x128xf32>
    %426 = arith.subf %424, %425 : vector<16x128xf32>
    %427 = arith.mulf %287, %358 : vector<16x128xf32>
    %428 = arith.mulf %349, %296 : vector<16x128xf32>
    %429 = arith.subf %427, %428 : vector<16x128xf32>
    %430 = arith.mulf %423, %423 : vector<16x128xf32>
    %431 = arith.mulf %426, %426 : vector<16x128xf32>
    %432 = arith.addf %430, %431 : vector<16x128xf32>
    %433 = arith.mulf %429, %429 : vector<16x128xf32>
    %434 = arith.addf %432, %433 : vector<16x128xf32>
    %cst_103 = arith.constant 1.000000e-24 : f32
    %435 = vector.broadcast %cst_103 : f32 to vector<16x128xf32>
    %436 = arith.maximumf %434, %435 : vector<16x128xf32>
    %437 = math.rsqrt %436 : vector<16x128xf32>
    %438 = arith.mulf %423, %437 : vector<16x128xf32>
    %c1_104 = arith.constant 1 : index
    %c0_105 = arith.constant 0 : index
    %c0_106 = arith.constant 0 : index
    %c0_107 = arith.constant 0 : index
    %439 = vector.load %arg3[%c1_104, %c0_105, %c0_106, %c0_107] : memref<2x3x16x128xf32, #tpu.memory_space<vmem>>, vector<1x1x16x128xf32>
    %440 = vector.shape_cast %439 : vector<1x1x16x128xf32> to vector<16x128xf32>
    %441 = vector.shape_cast %438 : vector<16x128xf32> to vector<1x1x16x128xf32>
    tpu.vector_store %arg3[%c1_104, %c0_105, %c0_106, %c0_107], %441 {strides = array<i32>} : memref<2x3x16x128xf32, #tpu.memory_space<vmem>>, vector<1x1x16x128xf32>,
    %442 = arith.mulf %426, %437 : vector<16x128xf32>
    %c1_108 = arith.constant 1 : index
    %c1_109 = arith.constant 1 : index
    %c0_110 = arith.constant 0 : index
    %c0_111 = arith.constant 0 : index
    %443 = vector.load %arg3[%c1_108, %c1_109, %c0_110, %c0_111] : memref<2x3x16x128xf32, #tpu.memory_space<vmem>>, vector<1x1x16x128xf32>
    %444 = vector.shape_cast %443 : vector<1x1x16x128xf32> to vector<16x128xf32>
    %445 = vector.shape_cast %442 : vector<16x128xf32> to vector<1x1x16x128xf32>
    tpu.vector_store %arg3[%c1_108, %c1_109, %c0_110, %c0_111], %445 {strides = array<i32>} : memref<2x3x16x128xf32, #tpu.memory_space<vmem>>, vector<1x1x16x128xf32>,
    %446 = arith.mulf %429, %437 : vector<16x128xf32>
    %c1_112 = arith.constant 1 : index
    %c2_113 = arith.constant 2 : index
    %c0_114 = arith.constant 0 : index
    %c0_115 = arith.constant 0 : index
    %447 = vector.load %arg3[%c1_112, %c2_113, %c0_114, %c0_115] : memref<2x3x16x128xf32, #tpu.memory_space<vmem>>, vector<1x1x16x128xf32>
    %448 = vector.shape_cast %447 : vector<1x1x16x128xf32> to vector<16x128xf32>
    %449 = vector.shape_cast %446 : vector<16x128xf32> to vector<1x1x16x128xf32>
    tpu.vector_store %arg3[%c1_112, %c2_113, %c0_114, %c0_115], %449 {strides = array<i32>} : memref<2x3x16x128xf32, #tpu.memory_space<vmem>>, vector<1x1x16x128xf32>,
    return
  }
  func.func @transform_0(%arg0: i32) -> (i32, i32, i32) {
    %c0_i32 = arith.constant 0 : i32
    %c0_i32_0 = arith.constant 0 : i32
    %c0_i32_1 = arith.constant 0 : i32
    return %arg0, %c0_i32, %c0_i32_0 : i32, i32, i32
  }
  func.func @transform_1(%arg0: i32) -> i32 {
    %c0_i32 = arith.constant 0 : i32
    %c0_i32_0 = arith.constant 0 : i32
    return %c0_i32 : i32
  }
  func.func @transform_2(%arg0: i32) -> (i32, i32, i32, i32) {
    %c0_i32 = arith.constant 0 : i32
    %c0_i32_0 = arith.constant 0 : i32
    %c0_i32_1 = arith.constant 0 : i32
    %c0_i32_2 = arith.constant 0 : i32
    return %arg0, %c0_i32, %c0_i32_0, %c0_i32_1 : i32, i32, i32, i32
  }
}

</mosaic_0001>

<llo_original>
// kernel: tpu_custom_call.1
$region0: #{tpu_custom_call.1}
  #allocation0 [shape = 'u32[]', space=smem, size = 0x4, offset = 0x4, fixed_abs, tag = 'smem constant byte address 0x4 - core index']
  #allocation1 [shape = 'u32[144,128]{1,0:T(1,128)}', space=vmem, size = 0x12000, scoped, tag = 'internal scratch']
  %s0 = inlined_call_operand.hbm [shape: f32[2,16,128], index: 0, kind: input, shape index: {}]
  %s1 = inlined_call_operand.vmem [shape: f32[18], index: 1, kind: input, shape index: {}]
  %s2 = inlined_call_operand.hbm [shape: f32[2,3,16,128], index: 2, kind: output, shape index: {}]
  %s3 = sld [smem:[#allocation0]]
  $region26: #{tpu_custom_call.1} parent=0
    _
  %s5 = ssub.s32 1, %s3
  %s6 = scalar_select 0, %s5, %s3
  $region1: #{tpu_custom_call.1} parent=0
    #allocation2 [shape = 'u8[16384]{0}', space=vmem, size = 0x4000, scoped, tag = 'input window, operand 0, single buffered']
    #allocation3 [shape = 's32[1]{0}', space=sflag, size = 0x4, scoped, tag = 'scoped memory for tpu_custom_call.1']
    #allocation4 [shape = 's32[1]{0}', space=sflag, size = 0x4, scoped, tag = 'scoped memory for tpu_custom_call.1']
    #allocation5 [shape = 's32[1]{0}', space=sflag, size = 0x4, scoped, tag = 'scoped memory for tpu_custom_call.1']
    #allocation6 [shape = 'u8[512]{0}', space=smem, size = 0x200, scoped, tag = 'input window, operand 1, single buffered']
    #allocation7 [shape = 'u8[49152]{0}', space=vmem, size = 0xc000, scoped, tag = 'output window, operand 0, single buffered']
    %7 = vsyncpa [#allocation3], 0
    %8 = vsyncpa [#allocation5], 0
    %9 = vsyncpa [#allocation4], 0
    // Predicated region
    $region2: #{tpu_custom_call.1} parent=1 // pred_check
      _
    $region3: #{tpu_custom_call.1} parent=1 // pred_check_branch
      %11 = sbr.rel (0) target = $region5
    $region4: #{tpu_custom_call.1} parent=1 // pred_region
      %s13 = ssub.s32 512, 512
      %14 = vsyncadd [#allocation3], %s13
      %s15 = sshll.u32 [#allocation2], 4
      %s16 = int_to_ptr.vmem [resolvable:$true] %s15
      %21 = dma.hbm_to_vmem [thread:$0]  %s0, 512, %s16, [#allocation3], 128, 128, 8
    $region5: #{tpu_custom_call.1} parent=1 // pred_fallthru
      _
    // Predicated region
    $region6: #{tpu_custom_call.1} parent=1 // pred_check
      _
    $region7: #{tpu_custom_call.1} parent=1 // pred_check_branch
      %23 = sbr.rel (0) target = $region9
    $region8: #{tpu_custom_call.1} parent=1 // pred_region
      %s25 = ssub.s32 16, 16
      %26 = vsyncadd [#allocation5], %s25
      %s28 = sshll.u32 %s1, 4
      %s29 = int_to_ptr.vmem [resolvable:$true] %s28
      %31 = dma.vmem_to_smem %s29, 16, [#allocation6], [#allocation5]
    $region9: #{tpu_custom_call.1} parent=1 // pred_fallthru
      _
    // Predicated region
    $region10: #{tpu_custom_call.1} parent=1 // pred_check
      _
    $region11: #{tpu_custom_call.1} parent=1 // pred_check_branch
      %33 = sbr.rel (0) target = $region13
    $region12: #{tpu_custom_call.1} parent=1 // pred_region
      %34 = dma.done [#allocation3], 512
    $region13: #{tpu_custom_call.1} parent=1 // pred_fallthru
      _
    // Predicated region
    $region14: #{tpu_custom_call.1} parent=1 // pred_check
      _
    $region15: #{tpu_custom_call.1} parent=1 // pred_check_branch
      %36 = sbr.rel (0) target = $region17
    $region16: #{tpu_custom_call.1} parent=1 // pred_region
      %37 = dma.done [#allocation5], 16
    $region17: #{tpu_custom_call.1} parent=1 // pred_fallthru
      _
    %38 = sfence
    %v39 = vlaneseq
    %v40 = vshrl.u32 %v39, 7
    %v41 = vadd.s32 %v40, 8
    %v42 = vlaneseq
    %v43 = vand.u32 %v42, 127
    %vm44 = vcmp.eq.s32.totalorder %v40, 0
    %vm45 = vcmp.eq.s32.totalorder %v41, 0
    %vm46 = vcmp.eq.s32.totalorder %v40, 15
    %vm47 = vcmp.eq.s32.totalorder %v41, 15
    %vm48 = vcmp.eq.s32.totalorder %v43, 0
    %vm49 = vcmp.ge.s32.totalorder %v43, 127
    %v50 = vcvt.s32.f32 %v40
    %v51 = vcvt.s32.f32 %v41
    %v52 = vadd.f32 %v50, 0.5
    %v53 = vadd.f32 %v51, 0.5
    %v54 = vcvt.s32.f32 %v43
    %v55 = vadd.f32 %v54, 0.5
    %v56 = vld [vmem:[#allocation2] sm:$0xff]
    %v57 = vld [vmem:[#allocation2 + $0x8] sm:$0xff]
    %s58 = smul.u32 0, 18
    %s59 = sld [smem:[#allocation6 + %s58]]
    %s60 = sadd.s32 %s58, 1
    %s61 = sld [smem:[#allocation6 + %s60]]
    %s62 = sadd.s32 %s58, 2
    %s63 = sld [smem:[#allocation6 + %s62]]
    %v64 = vstv %s59
    %v65 = vmul.f32 %v64, %v55
    %v66 = vstv %s61
    %v67 = vmul.f32 %v66, %v52
    %v68 = vmul.f32 %v66, %v53
    %v69 = vstv %s63
    %v70 = vadd.f32 %v67, %v69
    %v71 = vadd.f32 %v68, %v69
    %v72 = vadd.f32 %v65, %v70
    %v73 = vadd.f32 %v65, %v71
    %v74 = vmul.f32 %v56, %v72
    %v75 = vmul.f32 %v57, %v73
    %v76 = vadd.f32 %v74, %v74
    %v77 = vadd.f32 %v75, %v75
    %v78 = vrot.slane %v74, 7
    %v79 = vrot.slane %v75, 7
    %vm80 = vcmp.lt.s32.totalorder %v40, 1
    %v81 = vsel %vm80, %v78, %v79
    %v82 = vsel %vm80, %v79, %v78
    %v83 = vsel %vm44, 1, 0
    %v84 = vsel %vm45, 1, 0
    %vm85 = vcmp.eq.s32.totalorder %v83, 1
    %vm86 = vcmp.eq.s32.totalorder %v84, 1
    %v87 = vsel %vm85, %v74, %v82
    %v88 = vsel %vm86, %v75, %v81
    %v89 = vadd.f32 %v87, %v76
    %v90 = vadd.f32 %v88, %v77
    %v91 = vrot.slane %v74, 1
    %v92 = vrot.slane %v75, 1
    %vm93 = vcmp.lt.s32.totalorder %v40, 7
    %v94 = vsel %vm93, %v91, %v92
    %v95 = vsel %vm93, %v92, %v91
    %v96 = vsel %vm46, 1, 0
    %v97 = vsel %vm47, 1, 0
    %vm98 = vcmp.eq.s32.totalorder %v96, 1
    %vm99 = vcmp.eq.s32.totalorder %v97, 1
    %v100 = vsel %vm98, %v74, %v94
    %v101 = vsel %vm99, %v75, %v95
    %v102 = vadd.f32 %v89, %v100
    %v103 = vadd.f32 %v90, %v101
    %104 = vrot.lane.b32.xlu0 %v74, 1
    %v105 = vpop.permute.xlu0 %104
    %106 = vrot.lane.b32.xlu0 %v75, 1
    %v107 = vpop.permute.xlu0 %106
    %v108 = vsel %vm48, 1, 0
    %vm109 = vcmp.eq.s32.totalorder %v108, 1
    %v110 = vsel %vm109, %v74, %v105
    %v111 = vsel %vm109, %v75, %v107
    %v112 = vadd.f32 %v110, %v76
    %v113 = vadd.f32 %v111, %v77
    %114 = vrot.lane.b32.xlu0 %v74, 127
    %v115 = vpop.permute.xlu0 %114
    %116 = vrot.lane.b32.xlu0 %v75, 127
    %v117 = vpop.permute.xlu0 %116
    %v118 = vsel %vm49, 1, 0
    %vm119 = vcmp.eq.s32.totalorder %v118, 1
    %v120 = vsel %vm119, %v74, %v115
    %v121 = vsel %vm119, %v75, %v117
    %v122 = vadd.f32 %v112, %v120
    %v123 = vadd.f32 %v113, %v121
    %124 = vrot.lane.b32.xlu0 %v102, 127
    %v125 = vpop.permute.xlu0 %124
    %126 = vrot.lane.b32.xlu0 %v103, 127
    %v127 = vpop.permute.xlu0 %126
    %v128 = vsel %vm119, %v102, %v125
    %v129 = vsel %vm119, %v103, %v127
    %130 = vrot.lane.b32.xlu0 %v102, 1
    %v131 = vpop.permute.xlu0 %130
    %132 = vrot.lane.b32.xlu0 %v103, 1
    %v133 = vpop.permute.xlu0 %132
    %v134 = vsel %vm109, %v102, %v131
    %v135 = vsel %vm109, %v103, %v133
    %v136 = vsub.f32 %v128, %v134
    %v137 = vsub.f32 %v129, %v135
    %v138 = vrot.slane %v122, 1
    %v139 = vrot.slane %v123, 1
    %v140 = vsel %vm93, %v138, %v139
    %v141 = vsel %vm93, %v139, %v138
    %v142 = vsel %vm98, %v122, %v140
    %v143 = vsel %vm99, %v123, %v141
    %v144 = vrot.slane %v122, 7
    %v145 = vrot.slane %v123, 7
    %v146 = vsel %vm80, %v144, %v145
    %v147 = vsel %vm80, %v145, %v144
    %v148 = vsel %vm85, %v122, %v147
    %v149 = vsel %vm86, %v123, %v146
    %v150 = vsub.f32 %v142, %v148
    %v151 = vsub.f32 %v143, %v149
    %s152 = sadd.s32 %s58, 3
    %s153 = sld [smem:[#allocation6 + %s152]]
    %s154 = sadd.s32 %s58, 4
    %s155 = sld [smem:[#allocation6 + %s154]]
    %s156 = sadd.s32 %s58, 5
    %s157 = sld [smem:[#allocation6 + %s156]]
    %v158 = vstv %s153
    %v159 = vmul.f32 %v158, %v55
    %v160 = vstv %s155
    %v161 = vmul.f32 %v160, %v52
    %v162 = vmul.f32 %v160, %v53
    %v163 = vstv %s157
    %v164 = vadd.f32 %v161, %v163
    %v165 = vadd.f32 %v162, %v163
    %v166 = vadd.f32 %v159, %v164
    %v167 = vadd.f32 %v159, %v165
    %v168 = vmul.f32 %v56, %v166
    %v169 = vmul.f32 %v57, %v167
    %v170 = vadd.f32 %v168, %v168
    %v171 = vadd.f32 %v169, %v169
    %v172 = vrot.slane %v168, 7
    %v173 = vrot.slane %v169, 7
    %v174 = vsel %vm80, %v172, %v173
    %v175 = vsel %vm80, %v173, %v172
    %v176 = vsel %vm85, %v168, %v175
    %v177 = vsel %vm86, %v169, %v174
    %v178 = vadd.f32 %v176, %v170
    %v179 = vadd.f32 %v177, %v171
    %v180 = vrot.slane %v168, 1
    %v181 = vrot.slane %v169, 1
    %v182 = vsel %vm93, %v180, %v181
    %v183 = vsel %vm93, %v181, %v180
    %v184 = vsel %vm98, %v168, %v182
    %v185 = vsel %vm99, %v169, %v183
    %v186 = vadd.f32 %v178, %v184
    %v187 = vadd.f32 %v179, %v185
    %188 = vrot.lane.b32.xlu0 %v168, 1
    %v189 = vpop.permute.xlu0 %188
    %190 = vrot.lane.b32.xlu0 %v169, 1
    %v191 = vpop.permute.xlu0 %190
    %v192 = vsel %vm109, %v168, %v189
    %v193 = vsel %vm109, %v169, %v191
    %v194 = vadd.f32 %v192, %v170
    %v195 = vadd.f32 %v193, %v171
    %196 = vrot.lane.b32.xlu0 %v168, 127
    %v197 = vpop.permute.xlu0 %196
    %198 = vrot.lane.b32.xlu0 %v169, 127
    %v199 = vpop.permute.xlu0 %198
    %v200 = vsel %vm119, %v168, %v197
    %v201 = vsel %vm119, %v169, %v199
    %v202 = vadd.f32 %v194, %v200
    %v203 = vadd.f32 %v195, %v201
    %204 = vrot.lane.b32.xlu0 %v186, 127
    %v205 = vpop.permute.xlu0 %204
    %206 = vrot.lane.b32.xlu0 %v187, 127
    %v207 = vpop.permute.xlu0 %206
    %v208 = vsel %vm119, %v186, %v205
    %v209 = vsel %vm119, %v187, %v207
    %210 = vrot.lane.b32.xlu0 %v186, 1
    %v211 = vpop.permute.xlu0 %210
    %212 = vrot.lane.b32.xlu0 %v187, 1
    %v213 = vpop.permute.xlu0 %212
    %v214 = vsel %vm109, %v186, %v211
    %v215 = vsel %vm109, %v187, %v213
    %v216 = vsub.f32 %v208, %v214
    %v217 = vsub.f32 %v209, %v215
    %v218 = vrot.slane %v202, 1
    %v219 = vrot.slane %v203, 1
    %v220 = vsel %vm93, %v218, %v219
    %v221 = vsel %vm93, %v219, %v218
    %v222 = vsel %vm98, %v202, %v220
    %v223 = vsel %vm99, %v203, %v221
    %v224 = vrot.slane %v202, 7
    %v225 = vrot.slane %v203, 7
    %v226 = vsel %vm80, %v224, %v225
    %v227 = vsel %vm80, %v225, %v224
    %v228 = vsel %vm85, %v202, %v227
    %v229 = vsel %vm86, %v203, %v226
    %v230 = vsub.f32 %v222, %v228
    %v231 = vsub.f32 %v223, %v229
    %s232 = sadd.s32 %s58, 6
    %s233 = sld [smem:[#allocation6 + %s232]]
    %s234 = sadd.s32 %s58, 7
    %s235 = sld [smem:[#allocation6 + %s234]]
    %s236 = sadd.s32 %s58, 8
    %s237 = sld [smem:[#allocation6 + %s236]]
    %v238 = vstv %s233
    %v239 = vmul.f32 %v238, %v55
    %v240 = vstv %s235
    %v241 = vmul.f32 %v240, %v52
    %v242 = vmul.f32 %v240, %v53
    %v243 = vstv %s237
    %v244 = vadd.f32 %v241, %v243
    %v245 = vadd.f32 %v242, %v243
    %v246 = vadd.f32 %v239, %v244
    %v247 = vadd.f32 %v239, %v245
    %v248 = vmul.f32 %v56, %v246
    %v249 = vmul.f32 %v57, %v247
    %v250 = vadd.f32 %v248, %v248
    %v251 = vadd.f32 %v249, %v249
    %v252 = vrot.slane %v248, 7
    %v253 = vrot.slane %v249, 7
    %v254 = vsel %vm80, %v252, %v253
    %v255 = vsel %vm80, %v253, %v252
    %v256 = vsel %vm85, %v248, %v255
    %v257 = vsel %vm86, %v249, %v254
    %v258 = vadd.f32 %v256, %v250
    %v259 = vadd.f32 %v257, %v251
    %v260 = vrot.slane %v248, 1
    %v261 = vrot.slane %v249, 1
    %v262 = vsel %vm93, %v260, %v261
    %v263 = vsel %vm93, %v261, %v260
    %v264 = vsel %vm98, %v248, %v262
    %v265 = vsel %vm99, %v249, %v263
    %v266 = vadd.f32 %v258, %v264
    %v267 = vadd.f32 %v259, %v265
    %268 = vrot.lane.b32.xlu0 %v248, 1
    %v269 = vpop.permute.xlu0 %268
    %270 = vrot.lane.b32.xlu0 %v249, 1
    %v271 = vpop.permute.xlu0 %270
    %v272 = vsel %vm109, %v248, %v269
    %v273 = vsel %vm109, %v249, %v271
    %v274 = vadd.f32 %v272, %v250
    %v275 = vadd.f32 %v273, %v251
    %276 = vrot.lane.b32.xlu0 %v248, 127
    %v277 = vpop.permute.xlu0 %276
    %278 = vrot.lane.b32.xlu0 %v249, 127
    %v279 = vpop.permute.xlu0 %278
    %v280 = vsel %vm119, %v248, %v277
    %v281 = vsel %vm119, %v249, %v279
    %v282 = vadd.f32 %v274, %v280
    %v283 = vadd.f32 %v275, %v281
    %284 = vrot.lane.b32.xlu0 %v266, 127
    %v285 = vpop.permute.xlu0 %284
    %286 = vrot.lane.b32.xlu0 %v267, 127
    %v287 = vpop.permute.xlu0 %286
    %v288 = vsel %vm119, %v266, %v285
    %v289 = vsel %vm119, %v267, %v287
    %290 = vrot.lane.b32.xlu0 %v266, 1
    %v291 = vpop.permute.xlu0 %290
    %292 = vrot.lane.b32.xlu0 %v267, 1
    %v293 = vpop.permute.xlu0 %292
    %v294 = vsel %vm109, %v266, %v291
    %v295 = vsel %vm109, %v267, %v293
    %v296 = vsub.f32 %v288, %v294
    %v297 = vsub.f32 %v289, %v295
    %v298 = vrot.slane %v282, 1
    %v299 = vrot.slane %v283, 1
    %v300 = vsel %vm93, %v298, %v299
    %v301 = vsel %vm93, %v299, %v298
    %v302 = vsel %vm98, %v282, %v300
    %v303 = vsel %vm99, %v283, %v301
    %v304 = vrot.slane %v282, 7
    %v305 = vrot.slane %v283, 7
    %v306 = vsel %vm80, %v304, %v305
    %v307 = vsel %vm80, %v305, %v304
    %v308 = vsel %vm85, %v282, %v307
    %v309 = vsel %vm86, %v283, %v306
    %v310 = vsub.f32 %v302, %v308
    %v311 = vsub.f32 %v303, %v309
    %v312 = vmul.f32 %v216, %v310
    %v313 = vmul.f32 %v217, %v311
    %v314 = vmul.f32 %v296, %v230
    %v315 = vmul.f32 %v297, %v231
    %v316 = vsub.f32 %v312, %v314
    %v317 = vsub.f32 %v313, %v315
    %v318 = vmul.f32 %v296, %v150
    %v319 = vmul.f32 %v297, %v151
    %v320 = vmul.f32 %v136, %v310
    %v321 = vmul.f32 %v137, %v311
    %v322 = vsub.f32 %v318, %v320
    %v323 = vsub.f32 %v319, %v321
    %v324 = vmul.f32 %v136, %v230
    %v325 = vmul.f32 %v137, %v231
    %v326 = vmul.f32 %v216, %v150
    %v327 = vmul.f32 %v217, %v151
    %v328 = vsub.f32 %v324, %v326
    %v329 = vsub.f32 %v325, %v327
    %v330 = vmul.f32 %v316, %v316
    %v331 = vmul.f32 %v317, %v317
    %v332 = vmul.f32 %v322, %v322
    %v333 = vmul.f32 %v323, %v323
    %v334 = vadd.f32 %v330, %v332
    %v335 = vadd.f32 %v331, %v333
    %v336 = vmul.f32 %v328, %v328
    %v337 = vmul.f32 %v329, %v329
    %v338 = vadd.f32 %v334, %v336
    %v339 = vadd.f32 %v335, %v337
    %v340 = vmax.f32 %v338, 1e-24
    %v341 = vmax.f32 %v339, 1e-24
    %v342 = vrsqrt.pop %v340
    %v343 = vrsqrt.pop %v341
    %v344 = vmul.f32 %v316, %v342
    %v345 = vmul.f32 %v317, %v343
    %346 = vst [vmem:[#allocation7] sm:$0xff] %v344
    %347 = vst [vmem:[#allocation7 + $0x8] sm:$0xff] %v345
    %v348 = vmul.f32 %v322, %v342
    %v349 = vmul.f32 %v323, %v343
    %s350 = scalar_lea.vmem [#allocation7], 16
    %351 = vst [vmem:[%s350] sm:$0xff] %v348
    %352 = vst [vmem:[%s350 + $0x8] sm:$0xff] %v349
    %v353 = vmul.f32 %v328, %v342
    %v354 = vmul.f32 %v329, %v343
    %s355 = scalar_lea.vmem [#allocation7], 32
    %356 = vst [vmem:[%s355] sm:$0xff] %v353
    %357 = vst [vmem:[%s355 + $0x8] sm:$0xff] %v354
    %s358 = scalar_lea.vmem [#allocation2], 16
    %v359 = vld [vmem:[%s358] sm:$0xff]
    %v360 = vld [vmem:[%s358 + $0x8] sm:$0xff]
    %s361 = smul.u32 0, 2
    %s362 = sadd.s32 %s361, 1
    %s363 = smul.u32 %s362, 9
    %s364 = sld [smem:[#allocation6 + %s363]]
    %s365 = sadd.s32 %s363, 1
    %s366 = sld [smem:[#allocation6 + %s365]]
    %s367 = sadd.s32 %s363, 2
    %s368 = sld [smem:[#allocation6 + %s367]]
    %v369 = vstv %s364
    %v370 = vmul.f32 %v369, %v55
    %v371 = vstv %s366
    %v372 = vmul.f32 %v371, %v52
    %v373 = vmul.f32 %v371, %v53
    %v374 = vstv %s368
    %v375 = vadd.f32 %v372, %v374
    %v376 = vadd.f32 %v373, %v374
    %v377 = vadd.f32 %v370, %v375
    %v378 = vadd.f32 %v370, %v376
    %v379 = vmul.f32 %v359, %v377
    %v380 = vmul.f32 %v360, %v378
    %v381 = vadd.f32 %v379, %v379
    %v382 = vadd.f32 %v380, %v380
    %v383 = vrot.slane %v379, 7
    %v384 = vrot.slane %v380, 7
    %v385 = vsel %vm80, %v383, %v384
    %v386 = vsel %vm80, %v384, %v383
    %v387 = vsel %vm85, %v379, %v386
    %v388 = vsel %vm86, %v380, %v385
    %v389 = vadd.f32 %v387, %v381
    %v390 = vadd.f32 %v388, %v382
    %v391 = vrot.slane %v379, 1
    %v392 = vrot.slane %v380, 1
    %v393 = vsel %vm93, %v391, %v392
    %v394 = vsel %vm93, %v392, %v391
    %v395 = vsel %vm98, %v379, %v393
    %v396 = vsel %vm99, %v380, %v394
    %v397 = vadd.f32 %v389, %v395
    %v398 = vadd.f32 %v390, %v396
    %399 = vrot.lane.b32.xlu0 %v379, 1
    %v400 = vpop.permute.xlu0 %399
    %401 = vrot.lane.b32.xlu0 %v380, 1
    %v402 = vpop.permute.xlu0 %401
    %v403 = vsel %vm109, %v379, %v400
    %v404 = vsel %vm109, %v380, %v402
    %v405 = vadd.f32 %v403, %v381
    %v406 = vadd.f32 %v404, %v382
    %407 = vrot.lane.b32.xlu0 %v379, 127
    %v408 = vpop.permute.xlu0 %407
    %409 = vrot.lane.b32.xlu0 %v380, 127
    %v410 = vpop.permute.xlu0 %409
    %v411 = vsel %vm119, %v379, %v408
    %v412 = vsel %vm119, %v380, %v410
    %v413 = vadd.f32 %v405, %v411
    %v414 = vadd.f32 %v406, %v412
    %415 = vrot.lane.b32.xlu0 %v397, 127
    %v416 = vpop.permute.xlu0 %415
    %417 = vrot.lane.b32.xlu0 %v398, 127
    %v418 = vpop.permute.xlu0 %417
    %v419 = vsel %vm119, %v397, %v416
    %v420 = vsel %vm119, %v398, %v418
    %421 = vrot.lane.b32.xlu0 %v397, 1
    %v422 = vpop.permute.xlu0 %421
    %423 = vrot.lane.b32.xlu0 %v398, 1
    %v424 = vpop.permute.xlu0 %423
    %v425 = vsel %vm109, %v397, %v422
    %v426 = vsel %vm109, %v398, %v424
    %v427 = vsub.f32 %v419, %v425
    %v428 = vsub.f32 %v420, %v426
    %v429 = vrot.slane %v413, 1
    %v430 = vrot.slane %v414, 1
    %v431 = vsel %vm93, %v429, %v430
    %v432 = vsel %vm93, %v430, %v429
    %v433 = vsel %vm98, %v413, %v431
    %v434 = vsel %vm99, %v414, %v432
    %v435 = vrot.slane %v413, 7
    %v436 = vrot.slane %v414, 7
    %v437 = vsel %vm80, %v435, %v436
    %v438 = vsel %vm80, %v436, %v435
    %v439 = vsel %vm85, %v413, %v438
    %v440 = vsel %vm86, %v414, %v437
    %v441 = vsub.f32 %v433, %v439
    %v442 = vsub.f32 %v434, %v440
    %s443 = sadd.s32 %s363, 3
    %s444 = sld [smem:[#allocation6 + %s443]]
    %s445 = sadd.s32 %s363, 4
    %s446 = sld [smem:[#allocation6 + %s445]]
    %s447 = sadd.s32 %s363, 5
    %s448 = sld [smem:[#allocation6 + %s447]]
    %v449 = vstv %s444
    %v450 = vmul.f32 %v449, %v55
    %v451 = vstv %s446
    %v452 = vmul.f32 %v451, %v52
    %v453 = vmul.f32 %v451, %v53
    %v454 = vstv %s448
    %v455 = vadd.f32 %v452, %v454
    %v456 = vadd.f32 %v453, %v454
    %v457 = vadd.f32 %v450, %v455
    %v458 = vadd.f32 %v450, %v456
    %v459 = vmul.f32 %v359, %v457
    %v460 = vmul.f32 %v360, %v458
    %v461 = vadd.f32 %v459, %v459
    %v462 = vadd.f32 %v460, %v460
    %v463 = vrot.slane %v459, 7
    %v464 = vrot.slane %v460, 7
    %v465 = vsel %vm80, %v463, %v464
    %v466 = vsel %vm80, %v464, %v463
    %v467 = vsel %vm85, %v459, %v466
    %v468 = vsel %vm86, %v460, %v465
    %v469 = vadd.f32 %v467, %v461
    %v470 = vadd.f32 %v468, %v462
    %v471 = vrot.slane %v459, 1
    %v472 = vrot.slane %v460, 1
    %v473 = vsel %vm93, %v471, %v472
    %v474 = vsel %vm93, %v472, %v471
    %v475 = vsel %vm98, %v459, %v473
    %v476 = vsel %vm99, %v460, %v474
    %v477 = vadd.f32 %v469, %v475
    %v478 = vadd.f32 %v470, %v476
    %479 = vrot.lane.b32.xlu0 %v459, 1
    %v480 = vpop.permute.xlu0 %479
    %481 = vrot.lane.b32.xlu0 %v460, 1
    %v482 = vpop.permute.xlu0 %481
    %v483 = vsel %vm109, %v459, %v480
    %v484 = vsel %vm109, %v460, %v482
    %v485 = vadd.f32 %v483, %v461
    %v486 = vadd.f32 %v484, %v462
    %487 = vrot.lane.b32.xlu0 %v459, 127
    %v488 = vpop.permute.xlu0 %487
    %489 = vrot.lane.b32.xlu0 %v460, 127
    %v490 = vpop.permute.xlu0 %489
    %v491 = vsel %vm119, %v459, %v488
    %v492 = vsel %vm119, %v460, %v490
    %v493 = vadd.f32 %v485, %v491
    %v494 = vadd.f32 %v486, %v492
    %495 = vrot.lane.b32.xlu0 %v477, 127
    %v496 = vpop.permute.xlu0 %495
    %497 = vrot.lane.b32.xlu0 %v478, 127
    %v498 = vpop.permute.xlu0 %497
    %v499 = vsel %vm119, %v477, %v496
    %v500 = vsel %vm119, %v478, %v498
    %501 = vrot.lane.b32.xlu0 %v477, 1
    %v502 = vpop.permute.xlu0 %501
    %503 = vrot.lane.b32.xlu0 %v478, 1
    %v504 = vpop.permute.xlu0 %503
    %v505 = vsel %vm109, %v477, %v502
    %v506 = vsel %vm109, %v478, %v504
    %v507 = vsub.f32 %v499, %v505
    %v508 = vsub.f32 %v500, %v506
    %v509 = vrot.slane %v493, 1
    %v510 = vrot.slane %v494, 1
    %v511 = vsel %vm93, %v509, %v510
    %v512 = vsel %vm93, %v510, %v509
    %v513 = vsel %vm98, %v493, %v511
    %v514 = vsel %vm99, %v494, %v512
    %v515 = vrot.slane %v493, 7
    %v516 = vrot.slane %v494, 7
    %v517 = vsel %vm80, %v515, %v516
    %v518 = vsel %vm80, %v516, %v515
    %v519 = vsel %vm85, %v493, %v518
    %v520 = vsel %vm86, %v494, %v517
    %v521 = vsub.f32 %v513, %v519
    %v522 = vsub.f32 %v514, %v520
    %s523 = sadd.s32 %s363, 6
    %s524 = sld [smem:[#allocation6 + %s523]]
    %s525 = sadd.s32 %s363, 7
    %s526 = sld [smem:[#allocation6 + %s525]]
    %s527 = sadd.s32 %s363, 8
    %s528 = sld [smem:[#allocation6 + %s527]]
    %v529 = vstv %s524
    %v530 = vmul.f32 %v529, %v55
    %v531 = vstv %s526
    %v532 = vmul.f32 %v531, %v52
    %v533 = vmul.f32 %v531, %v53
    %v534 = vstv %s528
    %v535 = vadd.f32 %v532, %v534
    %v536 = vadd.f32 %v533, %v534
    %v537 = vadd.f32 %v530, %v535
    %v538 = vadd.f32 %v530, %v536
    %v539 = vmul.f32 %v359, %v537
    %v540 = vmul.f32 %v360, %v538
    %v541 = vadd.f32 %v539, %v539
    %v542 = vadd.f32 %v540, %v540
    %v543 = vrot.slane %v539, 7
    %v544 = vrot.slane %v540, 7
    %v545 = vsel %vm80, %v543, %v544
    %v546 = vsel %vm80, %v544, %v543
    %v547 = vsel %vm85, %v539, %v546
    %v548 = vsel %vm86, %v540, %v545
    %v549 = vadd.f32 %v547, %v541
    %v550 = vadd.f32 %v548, %v542
    %v551 = vrot.slane %v539, 1
    %v552 = vrot.slane %v540, 1
    %v553 = vsel %vm93, %v551, %v552
    %v554 = vsel %vm93, %v552, %v551
    %v555 = vsel %vm98, %v539, %v553
    %v556 = vsel %vm99, %v540, %v554
    %v557 = vadd.f32 %v549, %v555
    %v558 = vadd.f32 %v550, %v556
    %559 = vrot.lane.b32.xlu0 %v539, 1
    %v560 = vpop.permute.xlu0 %559
    %561 = vrot.lane.b32.xlu0 %v540, 1
    %v562 = vpop.permute.xlu0 %561
    %v563 = vsel %vm109, %v539, %v560
    %v564 = vsel %vm109, %v540, %v562
    %v565 = vadd.f32 %v563, %v541
    %v566 = vadd.f32 %v564, %v542
    %567 = vrot.lane.b32.xlu0 %v539, 127
    %v568 = vpop.permute.xlu0 %567
    %569 = vrot.lane.b32.xlu0 %v540, 127
    %v570 = vpop.permute.xlu0 %569
    %v571 = vsel %vm119, %v539, %v568
    %v572 = vsel %vm119, %v540, %v570
    %v573 = vadd.f32 %v565, %v571
    %v574 = vadd.f32 %v566, %v572
    %575 = vrot.lane.b32.xlu0 %v557, 127
    %v576 = vpop.permute.xlu0 %575
    %577 = vrot.lane.b32.xlu0 %v558, 127
    %v578 = vpop.permute.xlu0 %577
    %v579 = vsel %vm119, %v557, %v576
    %v580 = vsel %vm119, %v558, %v578
    %581 = vrot.lane.b32.xlu0 %v557, 1
    %v582 = vpop.permute.xlu0 %581
    %583 = vrot.lane.b32.xlu0 %v558, 1
    %v584 = vpop.permute.xlu0 %583
    %v585 = vsel %vm109, %v557, %v582
    %v586 = vsel %vm109, %v558, %v584
    %v587 = vsub.f32 %v579, %v585
    %v588 = vsub.f32 %v580, %v586
    %v589 = vrot.slane %v573, 1
    %v590 = vrot.slane %v574, 1
    %v591 = vsel %vm93, %v589, %v590
    %v592 = vsel %vm93, %v590, %v589
    %v593 = vsel %vm98, %v573, %v591
    %v594 = vsel %vm99, %v574, %v592
    %v595 = vrot.slane %v573, 7
    %v596 = vrot.slane %v574, 7
    %v597 = vsel %vm80, %v595, %v596
    %v598 = vsel %vm80, %v596, %v595
    %v599 = vsel %vm85, %v573, %v598
    %v600 = vsel %vm86, %v574, %v597
    %v601 = vsub.f32 %v593, %v599
    %v602 = vsub.f32 %v594, %v600
    %v603 = vmul.f32 %v507, %v601
    %v604 = vmul.f32 %v508, %v602
    %v605 = vmul.f32 %v587, %v521
    %v606 = vmul.f32 %v588, %v522
    %v607 = vsub.f32 %v603, %v605
    %v608 = vsub.f32 %v604, %v606
    %v609 = vmul.f32 %v587, %v441
    %v610 = vmul.f32 %v588, %v442
    %v611 = vmul.f32 %v427, %v601
    %v612 = vmul.f32 %v428, %v602
    %v613 = vsub.f32 %v609, %v611
    %v614 = vsub.f32 %v610, %v612
    %v615 = vmul.f32 %v427, %v521
    %v616 = vmul.f32 %v428, %v522
    %v617 = vmul.f32 %v507, %v441
    %v618 = vmul.f32 %v508, %v442
    %v619 = vsub.f32 %v615, %v617
    %v620 = vsub.f32 %v616, %v618
    %v621 = vmul.f32 %v607, %v607
    %v622 = vmul.f32 %v608, %v608
    %v623 = vmul.f32 %v613, %v613
    %v624 = vmul.f32 %v614, %v614
    %v625 = vadd.f32 %v621, %v623
    %v626 = vadd.f32 %v622, %v624
    %v627 = vmul.f32 %v619, %v619
    %v628 = vmul.f32 %v620, %v620
    %v629 = vadd.f32 %v625, %v627
    %v630 = vadd.f32 %v626, %v628
    %v631 = vmax.f32 %v629, 1e-24
    %v632 = vmax.f32 %v630, 1e-24
    %v633 = vrsqrt.pop %v631
    %v634 = vrsqrt.pop %v632
    %v635 = vmul.f32 %v607, %v633
    %v636 = vmul.f32 %v608, %v634
    %s637 = scalar_lea.vmem [#allocation7], 48
    %638 = vst [vmem:[%s637] sm:$0xff] %v635
    %639 = vst [vmem:[%s637 + $0x8] sm:$0xff] %v636
    %v640 = vmul.f32 %v613, %v633
    %v641 = vmul.f32 %v614, %v634
    %s642 = scalar_lea.vmem [#allocation7], 64
    %643 = vst [vmem:[%s642] sm:$0xff] %v640
    %644 = vst [vmem:[%s642 + $0x8] sm:$0xff] %v641
    %v645 = vmul.f32 %v619, %v633
    %v646 = vmul.f32 %v620, %v634
    %s647 = scalar_lea.vmem [#allocation7], 80
    %648 = vst [vmem:[%s647] sm:$0xff] %v645
    %649 = vst [vmem:[%s647 + $0x8] sm:$0xff] %v646
    // Predicated region
    $region18: #{tpu_custom_call.1} parent=1 // pred_check
      _
    $region19: #{tpu_custom_call.1} parent=1 // pred_check_branch
      %651 = sbr.rel (0) target = $region21
    $region20: #{tpu_custom_call.1} parent=1 // pred_region
      %s653 = ssub.s32 1536, 1536
      %654 = vsyncadd [#allocation4], %s653
      %s655 = sshll.u32 [#allocation7], 4
      %s656 = int_to_ptr.vmem [resolvable:$true] %s655
      %661 = dma.vmem_to_hbm [thread:$0]  %s656, 1536, %s2, [#allocation4], 128, 128, 8
    $region21: #{tpu_custom_call.1} parent=1 // pred_fallthru
      _
    // Predicated region
    $region22: #{tpu_custom_call.1} parent=1 // pred_check
      _
    $region23: #{tpu_custom_call.1} parent=1 // pred_check_branch
      %663 = sbr.rel (0) target = $region25
    $region24: #{tpu_custom_call.1} parent=1 // pred_region
      %664 = dma.done [#allocation4], 1536
    $region25: #{tpu_custom_call.1} parent=1 // pred_fallthru
      _
    %665 = vsyncpa [#allocation3], 1
    %666 = vsyncpa [#allocation4], 1
    %667 = vsyncpa [#allocation5], 1

</llo_original>
